<compile_context>
chip_gen: v7x
topology: tpu7x:2x2x1
jax: 0.10.0
libtpu: 0.0.40
codegen_flags: <defaults>
</compile_context>

<pallas_src>
import functools

import jax
import jax.numpy as jnp
from jax.experimental import pallas as pl
from jax.experimental.pallas import tpu as pltpu

# cfg.dfl_loss_weight -- deterministic in-script stand-in for the config value
DFL_LOSS_WEIGHT = 0.25

_TN_MAX = 8192     # max lane tile along the row (box) dimension
_NUM_CHUNKS = 2    # leading "parallel" grid axis (v7x megacore split)


def _dfl_sum_kernel(p_ref, t_ref, w_ref, out_ref, acc_ref, *,
                    n_valid, tn, tiles_per_chunk, n_bins):
    """p_ref: (C, tn) logits; t_ref/w_ref: (1, tn); out_ref: (1, 128) per-chunk
    partial sum; acc_ref: (1, tn) per-lane VMEM accumulator."""
    c = pl.program_id(0)          # chunk index ("parallel" axis)
    j = pl.program_id(1)          # lane-tile within chunk (reduction axis)

    @pl.when(j == 0)
    def _():
        acc_ref[...] = jnp.zeros_like(acc_ref)

    logits = p_ref[...]           # (C, tn) f32
    t = t_ref[...]                # (1, tn)
    w = w_ref[...]                # (1, tn)

    # Mask lanes past the real row count (tile padding / ragged tail).
    blk = c * tiles_per_chunk + j
    lane = jax.lax.broadcasted_iota(jnp.int32, (1, tn), 1)
    valid = (blk * tn + lane) < n_valid

    # Numerically stable log-sum-exp over the bin (sublane) axis.
    m = jnp.max(logits, axis=0, keepdims=True)                       # (1, tn)
    lse = jnp.log(jnp.sum(jnp.exp(logits - m), axis=0, keepdims=True)) + m

    # Two-hot target: left/right integer bins + linear interpolation weights.
    t_left = jnp.floor(t)
    l_idx = t_left.astype(jnp.int32)
    w_left = (t_left + 1.0) - t
    w_right = t - t_left

    bin_iota = jax.lax.broadcasted_iota(jnp.int32, (n_bins, tn), 0)
    pick_l = jnp.sum(jnp.where(bin_iota == l_idx, logits, 0.0),
                     axis=0, keepdims=True)
    pick_r = jnp.sum(jnp.where(bin_iota == (l_idx + 1), logits, 0.0),
                     axis=0, keepdims=True)

    # CE(p,l)*wl + CE(p,r)*wr == lse*(wl+wr) - (wl*p[l] + wr*p[r]); wl+wr == 1.
    loss = lse - (w_left * pick_l + w_right * pick_r)
    acc_ref[...] += jnp.where(valid, loss * w, 0.0)

    # Single cross-lane reduction + output store, once per chunk.
    @pl.when(j == pl.num_programs(1) - 1)
    def _():
        out_lane = jax.lax.broadcasted_iota(jnp.int32, (1, 128), 1)
        out_ref[...] = jnp.where(out_lane == 0, jnp.sum(acc_ref[...]), 0.0)


@functools.partial(jax.jit, static_argnames=("n_valid", "tn_max"))
def _dfl_loss_sum(preds_cf, t_row, w_row, *, n_valid, tn_max=_TN_MAX):
    """preds_cf: (C, N_pad) f32 channel-first logits; t_row/w_row: (1, N_pad).
    N_pad is a multiple of 128.  Returns (1, chunks*128) per-chunk partials."""
    n_bins, n_pad = preds_cf.shape
    assert n_pad % 128 == 0

    tn_max = max(128, (tn_max // 128) * 128)
    tn = min(tn_max, n_pad)
    n_tiles = pl.cdiv(n_pad, tn)
    chunks = _NUM_CHUNKS if (n_tiles >= 2 and n_tiles % _NUM_CHUNKS == 0) else 1
    tiles_per_chunk = n_tiles // chunks

    def row_map(c, j):
        return (0, c * tiles_per_chunk + j)

    kernel = functools.partial(
        _dfl_sum_kernel, n_valid=n_valid, tn=tn,
        tiles_per_chunk=tiles_per_chunk, n_bins=n_bins)

    return pl.pallas_call(
        kernel,
        out_shape=jax.ShapeDtypeStruct((1, chunks * 128), jnp.float32),
        grid_spec=pltpu.PrefetchScalarGridSpec(
            num_scalar_prefetch=0,
            grid=(chunks, tiles_per_chunk),
            in_specs=[
                pl.BlockSpec((n_bins, tn), row_map),
                pl.BlockSpec((1, tn), row_map),
                pl.BlockSpec((1, tn), row_map),
            ],
            out_specs=pl.BlockSpec((1, 128), lambda c, j: (0, c)),
            scratch_shapes=[pltpu.VMEM((1, tn), jnp.float32)],
        ),
        compiler_params=pltpu.CompilerParams(
            dimension_semantics=("parallel", "arbitrary")),
    )(preds_cf, t_row, w_row)


def dfl_loss(preds, targets, weights=None, avg_factor=None,
             loss_weight=DFL_LOSS_WEIGHT, tn_max=_TN_MAX,
             preds_channel_first=False):
    """JAX/Pallas equivalent of DFLLoss.forward.

    preds: [N, C] logits (or already channel-first [C, N] to skip the
    transpose).  targets: [N] float bin positions in [0, C-1).  weights:
    optional [N].  Returns a scalar.
    """
    preds = jnp.asarray(preds, jnp.float32)
    targets = jnp.asarray(targets, jnp.float32)

    if preds_channel_first:
        preds_cf = preds
        n = preds.shape[1]
    else:
        n = preds.shape[0]
        preds_cf = preds.T        # one XLA transpose to the channel-first layout

    t_row = targets.reshape(1, n)
    if weights is None:
        w_row = jnp.ones((1, n), jnp.float32)
    else:
        w_row = jnp.asarray(weights, jnp.float32).reshape(1, n)

    # Pad the lane axis only up to the next multiple of 128 when misaligned;
    # anything past the real n is masked inside the kernel.
    n_pad = ((n + 127) // 128) * 128
    if n_pad != n:
        preds_cf = jnp.pad(preds_cf, ((0, 0), (0, n_pad - n)))
        t_row = jnp.pad(t_row, ((0, 0), (0, n_pad - n)))
        w_row = jnp.pad(w_row, ((0, 0), (0, n_pad - n)))

    partials = _dfl_loss_sum(preds_cf, t_row, w_row, n_valid=n, tn_max=tn_max)
    loss = jnp.sum(partials) / 4.0
    if avg_factor is not None:
        loss = loss / avg_factor
    return loss * loss_weight


def _dfl_loss_ref(preds, targets, weights=None, avg_factor=None,
                  loss_weight=DFL_LOSS_WEIGHT):
    """Plain-JAX reference mirroring the PyTorch forward."""
    logp = jax.nn.log_softmax(preds, axis=-1)
    # targets.long() == floor for the non-negative DFL targets
    l_idx = jnp.floor(targets).astype(jnp.int32)
    r_idx = l_idx + 1
    w_left = (l_idx + 1).astype(jnp.float32) - targets
    w_right = targets - l_idx.astype(jnp.float32)
    ce_l = -jnp.take_along_axis(logp, l_idx[:, None], axis=1)[:, 0]
    ce_r = -jnp.take_along_axis(logp, r_idx[:, None], axis=1)[:, 0]
    loss = ce_l * w_left + ce_r * w_right
    if weights is not None:
        loss = loss * weights
    loss = loss.sum() / 4.0
    if avg_factor is not None:
        loss = loss / avg_factor
    return loss * loss_weight


if __name__ == "__main__":
    key = jax.random.PRNGKey(0)
    k1, k2, k3 = jax.random.split(key, 3)
    N, C = 512, 17   # C = reg_max + 1 bins, N = number of distance targets
    preds = jax.random.normal(k1, (N, C), jnp.float32)
    targets = jax.random.uniform(k2, (N,), jnp.float32,
                                 minval=0.0, maxval=C - 1.01)
    weights = jax.random.uniform(k3, (N,), jnp.float32, minval=0.0, maxval=1.0)

    cases = []
    # 1) single-tile path, no weights / no avg_factor
    cases.append((dfl_loss(preds[:128], targets[:128]),
                  _dfl_loss_ref(preds[:128], targets[:128])))
    # 2) weights + avg_factor
    cases.append((dfl_loss(preds[:128], targets[:128],
                           weights=weights[:128], avg_factor=128.0),
                  _dfl_loss_ref(preds[:128], targets[:128],
                                weights=weights[:128], avg_factor=128.0)))
    # 3) ragged N (pad-to-128 + in-kernel tail mask)
    cases.append((dfl_loss(preds[:37], targets[:37], weights=weights[:37]),
                  _dfl_loss_ref(preds[:37], targets[:37], weights=weights[:37])))
    # 4) multi-tile accumulation + 2-chunk "parallel" reduction (small tile)
    cases.append((dfl_loss(preds, targets, weights=weights,
                           avg_factor=float(N), tn_max=128),
                  _dfl_loss_ref(preds, targets, weights=weights,
                                avg_factor=float(N))))

    for got, want in cases:
        jax.block_until_ready(got)
        assert jnp.allclose(got, want, rtol=1e-5, atol=1e-5), (got, want)
    print("KERNEL_OK")
</pallas_src>

<mosaic_0001>
module attributes {stable_mosaic.version = 11 : i64} {
  func.func @_dfl_sum_kernel(%arg0: i32, %arg1: i32, %arg2: memref<17x128xf32, #tpu.memory_space<vmem>>, %arg3: memref<1x128xf32, #tpu.memory_space<vmem>>, %arg4: memref<1x128xf32, #tpu.memory_space<vmem>>, %arg5: memref<1x128xf32, #tpu.memory_space<vmem>>, %arg6: memref<1x128xf32, #tpu.memory_space<vmem>>) attributes {dimension_semantics = [#tpu.dimension_semantics<parallel>, #tpu.dimension_semantics<arbitrary>], iteration_bounds = array<i64: 1, 1>, scalar_prefetch = 0 : i64, scratch_operands = 1 : i64, tpu.core_type = #tpu.core_type<tc>, window_params = [{transform_indices = @transform_0, window_bounds = array<i64: 17, 128>}, {transform_indices = @transform_1, window_bounds = array<i64: 1, 128>}, {transform_indices = @transform_2, window_bounds = array<i64: 1, 128>}, {transform_indices = @transform_3, window_bounds = array<i64: 1, 128>}]} {
    %c0_i32 = arith.constant 0 : i32
    %0 = arith.cmpi eq, %arg1, %c0_i32 : i32
    %1 = arith.extui %0 : i1 to i32
    %c0_i32_0 = arith.constant 0 : i32
    %2 = arith.cmpi ne, %1, %c0_i32_0 : i32
    scf.if %2 {
      %cst_21 = arith.constant 0.000000e+00 : f32
      %57 = vector.broadcast %cst_21 : f32 to vector<1x128xf32>
      %c0_22 = arith.constant 0 : index
      %c0_23 = arith.constant 0 : index
      %58 = vector.load %arg6[%c0_22, %c0_23] : memref<1x128xf32, #tpu.memory_space<vmem>>, vector<1x128xf32>
      tpu.vector_store %arg6[%c0_22, %c0_23], %57 {strides = array<i32>} : memref<1x128xf32, #tpu.memory_space<vmem>>, vector<1x128xf32>,
    } else {
    }
    %c0 = arith.constant 0 : index
    %c0_1 = arith.constant 0 : index
    %3 = vector.load %arg2[%c0, %c0_1] : memref<17x128xf32, #tpu.memory_space<vmem>>, vector<17x128xf32>
    %c0_2 = arith.constant 0 : index
    %c0_3 = arith.constant 0 : index
    %4 = vector.load %arg3[%c0_2, %c0_3] : memref<1x128xf32, #tpu.memory_space<vmem>>, vector<1x128xf32>
    %c0_4 = arith.constant 0 : index
    %c0_5 = arith.constant 0 : index
    %5 = vector.load %arg4[%c0_4, %c0_5] : memref<1x128xf32, #tpu.memory_space<vmem>>, vector<1x128xf32>
    %c1_i32 = arith.constant 1 : i32
    %6 = arith.muli %arg0, %c1_i32 : i32
    %7 = arith.addi %6, %arg1 : i32
    %8 = tpu.iota {dimensions = array<i32: 1>} : vector<1x128xi32>
    %c128_i32 = arith.constant 128 : i32
    %9 = arith.muli %7, %c128_i32 : i32
    %10 = vector.broadcast %9 : i32 to vector<1x128xi32>
    %11 = arith.addi %10, %8 : vector<1x128xi32>
    %c128_i32_6 = arith.constant 128 : i32
    %12 = vector.broadcast %c128_i32_6 : i32 to vector<1x128xi32>
    %13 = arith.cmpi slt, %11, %12 : vector<1x128xi32>
    %cst = arith.constant dense<0xFF800000> : vector<128xf32>
    %14 = vector.multi_reduction <maximumf>, %3, %cst [0] : vector<17x128xf32> to vector<128xf32>
    %15 = vector.shape_cast %14 : vector<128xf32> to vector<1x128xf32>
    %16 = vector.broadcast %15 : vector<1x128xf32> to vector<17x128xf32>
    %17 = arith.subf %3, %16 : vector<17x128xf32>
    %18 = math.exp %17 : vector<17x128xf32>
    %cst_7 = arith.constant dense<0.000000e+00> : vector<128xf32>
    %19 = vector.multi_reduction <add>, %18, %cst_7 [0] : vector<17x128xf32> to vector<128xf32>
    %20 = vector.shape_cast %19 : vector<128xf32> to vector<1x128xf32>
    %21 = math.log %20 : vector<1x128xf32>
    %22 = arith.addf %21, %15 : vector<1x128xf32>
    %23 = math.floor %4 : vector<1x128xf32>
    %24 = arith.fptosi %23 : vector<1x128xf32> to vector<1x128xi32>
    %cst_8 = arith.constant 1.000000e+00 : f32
    %25 = vector.broadcast %cst_8 : f32 to vector<1x128xf32>
    %26 = arith.addf %23, %25 : vector<1x128xf32>
    %27 = arith.subf %26, %4 : vector<1x128xf32>
    %28 = arith.subf %4, %23 : vector<1x128xf32>
    %29 = tpu.iota {dimensions = array<i32: 0>} : vector<17x128xi32>
    %30 = vector.broadcast %24 : vector<1x128xi32> to vector<17x128xi32>
    %31 = arith.cmpi eq, %29, %30 : vector<17x128xi32>
    %cst_9 = arith.constant 0.000000e+00 : f32
    %32 = vector.broadcast %cst_9 : f32 to vector<17x128xf32>
    %33 = arith.select %31, %3, %32 : vector<17x128xi1>, vector<17x128xf32>
    %cst_10 = arith.constant dense<0.000000e+00> : vector<128xf32>
    %34 = vector.multi_reduction <add>, %33, %cst_10 [0] : vector<17x128xf32> to vector<128xf32>
    %35 = vector.shape_cast %34 : vector<128xf32> to vector<1x128xf32>
    %c1_i32_11 = arith.constant 1 : i32
    %36 = vector.broadcast %c1_i32_11 : i32 to vector<1x128xi32>
    %37 = arith.addi %24, %36 : vector<1x128xi32>
    %38 = vector.broadcast %37 : vector<1x128xi32> to vector<17x128xi32>
    %39 = arith.cmpi eq, %29, %38 : vector<17x128xi32>
    %cst_12 = arith.constant 0.000000e+00 : f32
    %40 = vector.broadcast %cst_12 : f32 to vector<17x128xf32>
    %41 = arith.select %39, %3, %40 : vector<17x128xi1>, vector<17x128xf32>
    %cst_13 = arith.constant dense<0.000000e+00> : vector<128xf32>
    %42 = vector.multi_reduction <add>, %41, %cst_13 [0] : vector<17x128xf32> to vector<128xf32>
    %43 = vector.shape_cast %42 : vector<128xf32> to vector<1x128xf32>
    %44 = arith.mulf %27, %35 : vector<1x128xf32>
    %45 = arith.mulf %28, %43 : vector<1x128xf32>
    %46 = arith.addf %44, %45 : vector<1x128xf32>
    %47 = arith.subf %22, %46 : vector<1x128xf32>
    %c0_14 = arith.constant 0 : index
    %c0_15 = arith.constant 0 : index
    %48 = vector.load %arg6[%c0_14, %c0_15] : memref<1x128xf32, #tpu.memory_space<vmem>>, vector<1x128xf32>
    %49 = arith.mulf %47, %5 : vector<1x128xf32>
    %cst_16 = arith.constant 0.000000e+00 : f32
    %50 = vector.broadcast %cst_16 : f32 to vector<1x128xf32>
    %51 = arith.select %13, %49, %50 : vector<1x128xi1>, vector<1x128xf32>
    %52 = arith.addf %48, %51 : vector<1x128xf32>
    %c0_17 = arith.constant 0 : index
    %c0_18 = arith.constant 0 : index
    %53 = vector.load %arg6[%c0_17, %c0_18] : memref<1x128xf32, #tpu.memory_space<vmem>>, vector<1x128xf32>
    tpu.vector_store %arg6[%c0_17, %c0_18], %52 {strides = array<i32>} : memref<1x128xf32, #tpu.memory_space<vmem>>, vector<1x128xf32>,
    %c0_i32_19 = arith.constant 0 : i32
    %54 = arith.cmpi eq, %arg1, %c0_i32_19 : i32
    %55 = arith.extui %54 : i1 to i32
    %c0_i32_20 = arith.constant 0 : i32
    %56 = arith.cmpi ne, %55, %c0_i32_20 : i32
    scf.if %56 {
      %57 = tpu.iota {dimensions = array<i32: 1>} : vector<1x128xi32>
      %c0_i32_21 = arith.constant 0 : i32
      %58 = vector.broadcast %c0_i32_21 : i32 to vector<1x128xi32>
      %59 = arith.cmpi eq, %57, %58 : vector<1x128xi32>
      %c0_22 = arith.constant 0 : index
      %c0_23 = arith.constant 0 : index
      %60 = vector.load %arg6[%c0_22, %c0_23] : memref<1x128xf32, #tpu.memory_space<vmem>>, vector<1x128xf32>
      %61 = vector.shape_cast %60 : vector<1x128xf32> to vector<1x1x128xf32>
      %cst_24 = arith.constant dense<0.000000e+00> : vector<1xf32>
      %62 = vector.multi_reduction <add>, %61, %cst_24 [1, 2] : vector<1x1x128xf32> to vector<1xf32>
      %63 = vector.shape_cast %62 : vector<1xf32> to vector<1x1x1xf32>
      %64 = vector.extract %63[0, 0, 0] : f32 from vector<1x1x1xf32>
      %cst_25 = arith.constant 0.000000e+00 : f32
      %65 = vector.broadcast %64 : f32 to vector<1x128xf32>
      %66 = vector.broadcast %cst_25 : f32 to vector<1x128xf32>
      %67 = arith.select %59, %65, %66 : vector<1x128xi1>, vector<1x128xf32>
      %c0_26 = arith.constant 0 : index
      %c0_27 = arith.constant 0 : index
      %68 = vector.load %arg5[%c0_26, %c0_27] : memref<1x128xf32, #tpu.memory_space<vmem>>, vector<1x128xf32>
      tpu.vector_store %arg5[%c0_26, %c0_27], %67 {strides = array<i32>} : memref<1x128xf32, #tpu.memory_space<vmem>>, vector<1x128xf32>,
    } else {
    }
    return
  }
  func.func @transform_0(%arg0: i32, %arg1: i32) -> (i32, i32) {
    %c1_i32 = arith.constant 1 : i32
    %0 = arith.muli %arg0, %c1_i32 : i32
    %1 = arith.addi %0, %arg1 : i32
    %c0_i32 = arith.constant 0 : i32
    %c0_i32_0 = arith.constant 0 : i32
    return %c0_i32, %1 : i32, i32
  }
  func.func @transform_1(%arg0: i32, %arg1: i32) -> (i32, i32) {
    %c1_i32 = arith.constant 1 : i32
    %0 = arith.muli %arg0, %c1_i32 : i32
    %1 = arith.addi %0, %arg1 : i32
    %c0_i32 = arith.constant 0 : i32
    %c0_i32_0 = arith.constant 0 : i32
    return %c0_i32, %1 : i32, i32
  }
  func.func @transform_2(%arg0: i32, %arg1: i32) -> (i32, i32) {
    %c1_i32 = arith.constant 1 : i32
    %0 = arith.muli %arg0, %c1_i32 : i32
    %1 = arith.addi %0, %arg1 : i32
    %c0_i32 = arith.constant 0 : i32
    %c0_i32_0 = arith.constant 0 : i32
    return %c0_i32, %1 : i32, i32
  }
  func.func @transform_3(%arg0: i32, %arg1: i32) -> (i32, i32) {
    %c0_i32 = arith.constant 0 : i32
    %c0_i32_0 = arith.constant 0 : i32
    return %c0_i32, %arg0 : i32, i32
  }
}

</mosaic_0001>

<llo_original>
// kernel: _dfl_loss_sum.1
$region0: #{_dfl_loss_sum.1}
  #allocation0 [shape = 'u32[]', space=smem, size = 0x4, offset = 0x4, fixed_abs, tag = 'smem constant byte address 0x4 - core index']
  #allocation1 [shape = 'u32[144,128]{1,0:T(1,128)}', space=vmem, size = 0x12000, scoped, tag = 'internal scratch']
  #allocation2 [shape = 'f32[1,128]{1,0:T(1,128)}', space=vmem, size = 0x200, scoped, tag = 'scratch operand']
  %s0 = inlined_call_operand.hbm [shape: f32[17,128], index: 0, kind: input, shape index: {}]
  %s1 = inlined_call_operand.vmem [shape: f32[1,128], index: 1, kind: input, shape index: {}]
  %s2 = inlined_call_operand.vmem [shape: f32[1,128], index: 2, kind: input, shape index: {}]
  %s3 = inlined_call_operand.hbm [shape: f32[1,128], index: 3, kind: output, shape index: {}]
  %s4 = sld [smem:[#allocation0]]
  $region34: #{_dfl_loss_sum.1} parent=0
    _
  %s6 = ssub.s32 1, %s4
  %s7 = scalar_select 0, %s6, %s4
  $region1: #{_dfl_loss_sum.1} parent=0
    #allocation3 [shape = 'u8[12288]{0}', space=vmem, size = 0x3000, scoped, tag = 'input window, operand 0, single buffered']
    #allocation4 [shape = 's32[1]{0}', space=sflag, size = 0x4, scoped, tag = 'scoped memory for _dfl_loss_sum.1']
    #allocation5 [shape = 's32[1]{0}', space=sflag, size = 0x4, scoped, tag = 'scoped memory for _dfl_loss_sum.1']
    #allocation6 [shape = 'u8[512]{0}', space=vmem, size = 0x400, scoped, tag = 'output window, operand 0, single buffered']
    %8 = vsyncpa [#allocation4], 0
    %9 = vsyncpa [#allocation5], 0
    // Predicated region
    $region2: #{_dfl_loss_sum.1} parent=1 // pred_check
      _
    $region3: #{_dfl_loss_sum.1} parent=1 // pred_check_branch
      %11 = sbr.rel (0) target = $region5
    $region4: #{_dfl_loss_sum.1} parent=1 // pred_region
      %s12 = sadd.s32 0, 0
      %s14 = ssub.s32 384, 384
      %15 = vsyncadd [#allocation4], %s14
      %s16 = smul.addr %s12, 128
      %s17 = scalar_lea.hbm %s0, %s16
      %s18 = sshll.u32 [#allocation3], 4
      %s19 = int_to_ptr.vmem [resolvable:$true] %s18
      %24 = dma.hbm_to_vmem [thread:$0]  %s17, 384, %s19, [#allocation4], 128, 128, 8
    $region5: #{_dfl_loss_sum.1} parent=1 // pred_fallthru
      _
    // Predicated region
    $region6: #{_dfl_loss_sum.1} parent=1 // pred_check
      _
    $region7: #{_dfl_loss_sum.1} parent=1 // pred_check_branch
      %26 = sbr.rel (0) target = $region9
    $region8: #{_dfl_loss_sum.1} parent=1 // pred_region
      %s27 = sadd.s32 0, 0
      %p28 = scmp.lt.s32.totalorder %s27, 0
      %s29 = scalar_select %p28, %s27, 0
      %s30 = scalar_lea.vmem %s1, %s29
      %s31 = sadd.s32 0, 0
    $region9: #{_dfl_loss_sum.1} parent=1 // pred_fallthru
      _
    // Predicated region
    $region10: #{_dfl_loss_sum.1} parent=1 // pred_check
      _
    $region11: #{_dfl_loss_sum.1} parent=1 // pred_check_branch
      %33 = sbr.rel (0) target = $region13
    $region12: #{_dfl_loss_sum.1} parent=1 // pred_region
      %s34 = sadd.s32 0, 0
      %p35 = scmp.lt.s32.totalorder %s34, 0
      %s36 = scalar_select %p35, %s34, 0
      %s37 = scalar_lea.vmem %s2, %s36
      %s38 = sadd.s32 0, 0
    $region13: #{_dfl_loss_sum.1} parent=1 // pred_fallthru
      _
    // Predicated region
    $region14: #{_dfl_loss_sum.1} parent=1 // pred_check
      _
    $region15: #{_dfl_loss_sum.1} parent=1 // pred_check_branch
      %40 = sbr.rel (0) target = $region17
    $region16: #{_dfl_loss_sum.1} parent=1 // pred_region
      %41 = dma.done [#allocation4], 384
    $region17: #{_dfl_loss_sum.1} parent=1 // pred_fallthru
      _
    %s42 = sadd.s32 0, 0
    %p43 = scmp.lt.s32.totalorder %s42, 0
    %s44 = scalar_select %p43, %s42, 0
    %s45 = scalar_lea.vmem %s1, %s44
    %s46 = sadd.s32 0, 0
    %p47 = scmp.lt.s32.totalorder %s46, 0
    %s48 = scalar_select %p47, %s46, 0
    %s49 = scalar_lea.vmem %s2, %s48
    %s50 = sadd.s32 0, 0
    %s51 = sadd.s32 0, 0
    %p52 = scmp.lt.s32.totalorder %s51, 0
    %s53 = scalar_select %p52, %s51, 0
    %s54 = scalar_lea.vmem %s1, %s53
    %s55 = sadd.s32 0, 0
    %s56 = sadd.s32 0, 0
    %p57 = scmp.lt.s32.totalorder %s56, 0
    %s58 = scalar_select %p57, %s56, 0
    %s59 = scalar_lea.vmem %s2, %s58
    %s60 = sadd.s32 0, 0
    %p61 = scmp.eq.s32.totalorder 0, 0
    // Predicated region
    $region18: #{_dfl_loss_sum.1} parent=1 // pred_check
      %p62 = pneg %p61
    $region19: #{_dfl_loss_sum.1} parent=1 // pred_check_branch
      %64 = sbr.rel (%p62) target = $region21
    $region20: #{_dfl_loss_sum.1} parent=1 // pred_region
      %65 = vst [vmem:[#allocation2] sm:$0x1] 0.0
    $region21: #{_dfl_loss_sum.1} parent=1 // pred_fallthru
      _
    %v66 = vld [vmem:[#allocation3] sm:$0xff]
    %v67 = vld [vmem:[#allocation3 + $0x8] sm:$0xff]
    %v68 = vld [vmem:[#allocation3 + $0x10] sm:$0x1]
    %v69 = vld [vmem:[%s54] sm:$0x1]
    %v70 = vld [vmem:[%s59] sm:$0x1]
    %s71 = sadd.s32 0, 0
    %v72 = vlaneseq
    %v73 = vand.u32 %v72, 127
    %s74 = smul.u32 %s71, 128
    %v75 = vstv %s74
    %v76 = vadd.s32 %v75, %v73
    %vm77 = vcmp.lt.s32.totalorder %v76, 128
    %vm78 = vcmask 1040384
    %v79 = vsel %vm78, %v68, -inf
    %v80 = vmax.f32 %v66, %v67
    %v81 = vmax.f32 %v80, %v79
    %v82 = vrot.slane %v81, 4
    %v83 = vmax.f32 %v81, %v82
    %v84 = vrot.slane %v83, 2
    %v85 = vmax.f32 %v83, %v84
    %v86 = vrot.slane %v85, 1
    %v87 = vmax.f32 %v85, %v86
    %v88 = vsub.f32 %v66, %v87
    %v89 = vsub.f32 %v67, %v87
    %v90 = vsub.f32 %v68, %v87
    %v91 = vmul.f32 %v88, 1.442695
    %v92 = vpow.pop %v91
    %v93 = vmul.f32 %v89, 1.442695
    %v94 = vpow.pop %v93
    %v95 = vmul.f32 %v90, 1.442695
    %v96 = vpow.pop %v95
    %v97 = vadd.f32 %v92, %v94
    %v98 = vsel %vm78, %v96, 0.0
    %v99 = vadd.f32 %v97, %v98
    %v100 = vrot.slane %v99, 4
    %v101 = vadd.f32 %v99, %v100
    %v102 = vrot.slane %v101, 2
    %v103 = vadd.f32 %v101, %v102
    %v104 = vrot.slane %v103, 1
    %v105 = vadd.f32 %v103, %v104
    %v106 = vlog2.pop %v105
    %v107 = vmul.f32 %v106, 0.6931472
    %v108 = vadd.f32 %v107, %v87
    %v109 = vfloor.f32 %v69
    %v110 = vcvt.f32.s32.to.zero.pseudo %v109
    %v111 = vadd.f32 %v109, 1.0
    %v112 = vsub.f32 %v111, %v69
    %v113 = vsub.f32 %v69, %v109
    %v114 = vlaneseq
    %v115 = vshrl.u32 %v114, 7
    %v116 = vadd.s32 %v115, 8
    %v117 = vadd.s32 %v115, 16
    %v118 = vlaneseq
    %v119 = vshrl.u32 %v118, 7
    %v120 = vsub.s32 0, %v119
    %v121 = vrot.slane %v110, %v120
    %vm122 = vcmp.eq.s32.totalorder %v115, %v121
    %vm123 = vcmp.eq.s32.totalorder %v116, %v121
    %vm124 = vcmp.eq.s32.totalorder %v117, %v121
    %v125 = vsel %vm122, %v66, 0.0
    %v126 = vsel %vm123, %v67, 0.0
    %v127 = vsel %vm124, %v68, 0.0
    %v128 = vadd.f32 %v125, %v126
    %v129 = vsel %vm78, %v127, 0.0
    %v130 = vadd.f32 %v128, %v129
    %v131 = vrot.slane %v130, 4
    %v132 = vadd.f32 %v130, %v131
    %v133 = vrot.slane %v132, 2
    %v134 = vadd.f32 %v132, %v133
    %v135 = vrot.slane %v134, 1
    %v136 = vadd.f32 %v134, %v135
    %v137 = vadd.s32 %v110, 1
    %v138 = vlaneseq
    %v139 = vshrl.u32 %v138, 7
    %v140 = vsub.s32 0, %v139
    %v141 = vrot.slane %v137, %v140
    %vm142 = vcmp.eq.s32.totalorder %v115, %v141
    %vm143 = vcmp.eq.s32.totalorder %v116, %v141
    %vm144 = vcmp.eq.s32.totalorder %v117, %v141
    %v145 = vsel %vm142, %v66, 0.0
    %v146 = vsel %vm143, %v67, 0.0
    %v147 = vsel %vm144, %v68, 0.0
    %v148 = vadd.f32 %v145, %v146
    %v149 = vsel %vm78, %v147, 0.0
    %v150 = vadd.f32 %v148, %v149
    %v151 = vrot.slane %v150, 4
    %v152 = vadd.f32 %v150, %v151
    %v153 = vrot.slane %v152, 2
    %v154 = vadd.f32 %v152, %v153
    %v155 = vrot.slane %v154, 1
    %v156 = vadd.f32 %v154, %v155
    %v157 = vmul.f32 %v112, %v136
    %v158 = vmul.f32 %v113, %v156
    %v159 = vadd.f32 %v157, %v158
    %v160 = vsub.f32 %v108, %v159
    %v161 = vld [vmem:[#allocation2] sm:$0x1]
    %v162 = vmul.f32 %v160, %v70
    %v163 = vsel %vm77, %v162, 0.0
    %v164 = vadd.f32 %v161, %v163
    %165 = vst [vmem:[#allocation2] sm:$0x1] %v164
    // Predicated region
    $region22: #{_dfl_loss_sum.1} parent=1 // pred_check
      %p166 = pneg %p61
    $region23: #{_dfl_loss_sum.1} parent=1 // pred_check_branch
      %168 = sbr.rel (%p166) target = $region25
    $region24: #{_dfl_loss_sum.1} parent=1 // pred_region
      %vm169 = vcmp.eq.s32.totalorder %v73, 0
      %v170 = vld [vmem:[#allocation2] sm:$0x1]
      %v171 = vsel %vm78, %v170, 0.0
      %172 = vadd.xlane.f32.xlu0 %v171
      %v173 = vpop.xlane.xlu0 %172
      %v174 = vrot.slane %v173, 4
      %v175 = vadd.f32 %v173, %v174
      %v176 = vrot.slane %v175, 2
      %v177 = vadd.f32 %v175, %v176
      %v178 = vrot.slane %v177, 1
      %v179 = vadd.f32 %v177, %v178
      %s180 = vtos %v179
      %v181 = vstv %s180
      %v182 = vsel %vm169, %v181, 0.0
      %183 = vst [vmem:[#allocation6] sm:$0x1] %v182
    $region25: #{_dfl_loss_sum.1} parent=1 // pred_fallthru
      _
    // Predicated region
    $region26: #{_dfl_loss_sum.1} parent=1 // pred_check
      _
    $region27: #{_dfl_loss_sum.1} parent=1 // pred_check_branch
      %185 = sbr.rel (0) target = $region29
    $region28: #{_dfl_loss_sum.1} parent=1 // pred_region
      %s187 = ssub.s32 16, 16
      %188 = vsyncadd [#allocation5], %s187
      %s190 = sshll.u32 [#allocation6], 4
      %s191 = int_to_ptr.vmem [resolvable:$true] %s190
      %193 = dma.vmem_to_hbm [thread:$0]  %s191, 16, %s3, [#allocation5]
    $region29: #{_dfl_loss_sum.1} parent=1 // pred_fallthru
      _
    // Predicated region
    $region30: #{_dfl_loss_sum.1} parent=1 // pred_check
      _
    $region31: #{_dfl_loss_sum.1} parent=1 // pred_check_branch
      %195 = sbr.rel (0) target = $region33
    $region32: #{_dfl_loss_sum.1} parent=1 // pred_region
      %196 = dma.done [#allocation5], 16
    $region33: #{_dfl_loss_sum.1} parent=1 // pred_fallthru
      _
    %197 = vsyncpa [#allocation4], 1
    %198 = vsyncpa [#allocation5], 1

</llo_original>
